<compile_context>
chip_gen: v7x
topology: tpu7x:2x2x1
jax: 0.10.0
libtpu: 0.0.40
codegen_flags: <defaults>
</compile_context>

<pallas_src>
import functools

import jax
import jax.numpy as jnp
from jax import lax
from jax.experimental import pallas as pl
from jax.experimental.pallas import tpu as pltpu


def find_multiple(n: int, k: int) -> int:
    if n % k == 0:
        return n
    return n + k - n % k


def _tpu_vmem_bytes() -> int:
    """Per-core VMEM capacity (128 MiB on v5e/v6e, 64 MiB/TC on v7x)."""
    try:
        return int(pltpu.get_tpu_info().vmem_capacity_bytes)
    except Exception:
        return 128 * 1024 * 1024


def _working_set_bytes(tm, ti, D, x_sz, w_sz) -> int:
    """Double-buffered input/output tiles + resident f32 accumulator."""
    return (2 * tm * D * x_sz            # x tile
            + 2 * 2 * ti * D * w_sz      # w1, w3 tiles
            + 2 * ti * D * w_sz          # w2T tile
            + 2 * tm * D * x_sz          # out tile
            + tm * D * 4)                # f32 accumulator (single buffer)


def _pick_tiles(M, D, I, x_sz, w_sz, vmem_budget):
    """Largest (tm, ti) whose working set fits the VMEM budget.

    tm is maximized first (it sets FLOPs-per-weight-byte = arithmetic intensity),
    then ti (fewer reduction steps -> less accumulator VMEM traffic + less grid
    overhead).  ti must divide I exactly (OOB intermediate columns would corrupt
    the reduction); I is a multiple of 256 per ModelArgs.__post_init__.
    """
    ti_candidates = [t for t in (512, 384, 256, 128) if t <= I and I % t == 0]
    if not ti_candidates:
        ti_candidates = [I]   # tiny / odd I only (never for realistic configs)

    tm_candidates = [t for t in (1024, 768, 512, 384, 256, 128) if t <= M] or [M]

    for tm in tm_candidates:
        for ti in ti_candidates:
            if _working_set_bytes(tm, ti, D, x_sz, w_sz) <= vmem_budget:
                return tm, ti
    return tm_candidates[-1], ti_candidates[-1]


def ffn_kernel(x_ref, w1_ref, w3_ref, w2t_ref, o_ref, acc_ref):
    # x_ref:   (tm, D)  token tile
    # w1_ref:  (ti, D)  rows of w1 for this intermediate tile (native (I, D) layout)
    # w3_ref:  (ti, D)
    # w2t_ref: (ti, D)  rows of w2.T for this intermediate tile (pre-transposed)
    # o_ref:   (tm, D)  written once, on the last I-step
    # acc_ref: (tm, D)  f32 accumulator, resident across the I (reduction) axis
    j = pl.program_id(1)

    @pl.when(j == 0)
    def _init():
        acc_ref[...] = jnp.zeros_like(acc_ref)

    x = x_ref[...]
    # h = x @ w.T : contract D with D ("nt" form, native to the MXU — no transpose).
    dn_nt = (((1,), (1,)), ((), ()))
    h1 = lax.dot_general(x, w1_ref[...], dn_nt, preferred_element_type=jnp.float32)
    h3 = lax.dot_general(x, w3_ref[...], dn_nt, preferred_element_type=jnp.float32)

    # SwiGLU gating in f32 (sigmoid goes to the EUP, hidden under the MXU).
    gate = (h1 * jax.nn.sigmoid(h1)) * h3
    # TODO(synk): dropout == identity (eval / inference mode).

    # Partial second matmul: gate[tm, ti] @ w2T[ti, D] -> [tm, D], accumulated in f32.
    # gate cast back to the weight dtype so bf16 weights hit the full-rate MXU.
    acc_ref[...] += jnp.dot(gate.astype(w2t_ref.dtype), w2t_ref[...],
                            preferred_element_type=jnp.float32)

    @pl.when(j == pl.num_programs(1) - 1)
    def _finalize():
        o_ref[...] = acc_ref[...].astype(o_ref.dtype)


@functools.partial(jax.jit, static_argnames=("tm", "ti"))
def feed_forward(x, w1, w3, w2, *, tm=None, ti=None):
    """x: (B, S, D). w1, w3: (I, D). w2: (D, I). Returns (B, S, D).

    tm/ti default to an auto-tuned choice against the detected VMEM capacity.
    For inference you may cast inputs/weights to bf16 before calling (full-rate
    MXU + half the weight HBM stream); this wrapper preserves the caller's dtype.
    """
    B, S, D = x.shape
    I = w1.shape[0]
    M = B * S
    x2d = x.reshape(M, D)

    # Pre-transpose w2 (D, I) -> (I, D) once: contiguous (ti, D) tile DMAs and a
    # plain [M,ti]x[ti,D] second matmul.  (In production store the weight
    # pre-transposed so this is free at weight-load time.)
    w2t = w2.T

    x_sz = x2d.dtype.itemsize
    w_sz = w1.dtype.itemsize

    vmem_cap = _tpu_vmem_bytes()
    vmem_budget = int(0.80 * vmem_cap)

    tm_sel, ti_sel = _pick_tiles(M, D, I, x_sz, w_sz, vmem_budget)
    if tm is not None:
        tm_sel = min(tm, M)
    if ti is not None and ti <= I and I % ti == 0:
        ti_sel = ti

    # Megacore (v7x: 2 TCs, 64 MiB VMEM/TC): ensure the "parallel" token axis has
    # >=2 blocks so the second TensorCore isn't idle for small/medium M.  On
    # single-TC chips splitting would only re-stream the weights, so skip it.
    if vmem_cap <= 64 * 1024 * 1024 and M > 256 and pl.cdiv(M, tm_sel) < 2:
        tm_sel = max(128, ((M + 1) // 2 + 7) // 8 * 8)

    grid = (pl.cdiv(M, tm_sel), I // ti_sel)
    n_tok_blocks = grid[0]

    est = _working_set_bytes(tm_sel, ti_sel, D, x_sz, w_sz)
    vmem_limit = int(min(0.9 * vmem_cap, max(32 * 1024 * 1024, 1.4 * est)))

    cost = pl.CostEstimate(
        flops=6 * M * D * I,                      # three M x D x I matmuls
        transcendentals=M * I,                    # sigmoid
        bytes_accessed=(3 * D * I * w_sz * n_tok_blocks   # weights re-streamed per token block
                        + 2 * M * D * x_sz),               # x read + out write
    )

    # NOTE: for the toy D=32 case the output last dim is <128 lanes (masked
    # stores); production D (e.g. 4096) is lane-dense.
    out2d = pl.pallas_call(
        ffn_kernel,
        out_shape=jax.ShapeDtypeStruct((M, D), x.dtype),
        grid_spec=pltpu.PrefetchScalarGridSpec(
            num_scalar_prefetch=0,
            grid=grid,
            in_specs=[
                pl.BlockSpec((tm_sel, D), lambda i, j: (i, 0)),   # x rows tile
                pl.BlockSpec((ti_sel, D), lambda i, j: (j, 0)),   # w1 tile
                pl.BlockSpec((ti_sel, D), lambda i, j: (j, 0)),   # w3 tile
                pl.BlockSpec((ti_sel, D), lambda i, j: (j, 0)),   # w2.T tile
            ],
            out_specs=pl.BlockSpec((tm_sel, D), lambda i, j: (i, 0)),
            scratch_shapes=[pltpu.VMEM((tm_sel, D), jnp.float32)],
        ),
        compiler_params=pltpu.CompilerParams(
            dimension_semantics=("parallel", "arbitrary"),
            vmem_limit_bytes=vmem_limit,
        ),
        cost_estimate=cost,
    )(x2d, w1, w3, w2t)
    return out2d.reshape(B, S, D)


def reference_feed_forward(x, w1, w3, w2):
    h1 = jnp.einsum("bsd,id->bsi", x, w1)
    h3 = jnp.einsum("bsd,id->bsi", x, w3)
    h = (h1 * jax.nn.sigmoid(h1)) * h3
    return jnp.einsum("bsi,di->bsd", h, w2)


if __name__ == "__main__":
    # Small config consistent with ModelArgs.__post_init__:
    #   dim = 32 -> hidden = 4*32 = 128, n_hidden = int(2*128/3) = 85,
    #   intermediate_size = find_multiple(85, 256) = 256.
    dim = 32
    intermediate_size = find_multiple(int(2 * (4 * dim) / 3), 256)  # 256
    batch, seq = 2, 8

    key = jax.random.PRNGKey(0)
    kx, k1, k3, k2 = jax.random.split(key, 4)
    x = jax.random.normal(kx, (batch, seq, dim), dtype=jnp.float32)
    # nn.Linear(dim, intermediate, bias=False).weight -> (intermediate, dim)
    w1 = jax.random.normal(k1, (intermediate_size, dim), dtype=jnp.float32) * 0.05
    w3 = jax.random.normal(k3, (intermediate_size, dim), dtype=jnp.float32) * 0.05
    # nn.Linear(intermediate, dim, bias=False).weight -> (dim, intermediate)
    w2 = jax.random.normal(k2, (dim, intermediate_size), dtype=jnp.float32) * 0.05

    # f32 path (matches the PyTorch module numerically)
    out = feed_forward(x, w1, w3, w2)
    out = jax.block_until_ready(out)
    ref = reference_feed_forward(x, w1, w3, w2)
    assert out.shape == (batch, seq, dim)
    assert jnp.allclose(out, ref, atol=1e-4, rtol=1e-4), "f32 mismatch vs reference"

    # bf16 path (full-rate MXU with f32 accumulation) — looser tolerance.
    xb, w1b, w3b, w2b = (a.astype(jnp.bfloat16) for a in (x, w1, w3, w2))
    out_bf = feed_forward(xb, w1b, w3b, w2b)
    out_bf = jax.block_until_ready(out_bf)
    ref_bf = reference_feed_forward(*(a.astype(jnp.float32) for a in (xb, w1b, w3b, w2b)))
    assert jnp.allclose(out_bf.astype(jnp.float32), ref_bf, atol=5e-2, rtol=5e-2), \
        "bf16 mismatch vs reference"

    # Token count not a multiple of the token tile (exercises the padded last
    # block / masked writeback path): M = 2*72 = 144 > 128 -> tm = 128, 2 blocks.
    x_odd = jax.random.normal(kx, (2, 72, dim), dtype=jnp.float32)
    out_odd = jax.block_until_ready(feed_forward(x_odd, w1, w3, w2, tm=128))
    ref_odd = reference_feed_forward(x_odd, w1, w3, w2)
    assert jnp.all(jnp.isfinite(out_odd)), "NaN/Inf leaked from padded block"
    assert jnp.allclose(out_odd, ref_odd, atol=1e-4, rtol=1e-4), \
        "mismatch vs reference with M % tm != 0"

    print("KERNEL_OK")
</pallas_src>

<mosaic_0001>
module attributes {stable_mosaic.version = 11 : i64} {
  func.func @ffn_kernel(%arg0: i32, %arg1: i32, %arg2: memref<16x32xf32, #tpu.memory_space<vmem>>, %arg3: memref<256x32xf32, #tpu.memory_space<vmem>>, %arg4: memref<256x32xf32, #tpu.memory_space<vmem>>, %arg5: memref<256x32xf32, #tpu.memory_space<vmem>>, %arg6: memref<16x32xf32, #tpu.memory_space<vmem>>, %arg7: memref<16x32xf32, #tpu.memory_space<vmem>>) attributes {dimension_semantics = [#tpu.dimension_semantics<parallel>, #tpu.dimension_semantics<arbitrary>], iteration_bounds = array<i64: 1, 1>, scalar_prefetch = 0 : i64, scratch_operands = 1 : i64, tpu.core_type = #tpu.core_type<tc>, window_params = [{transform_indices = @transform_0, window_bounds = array<i64: 16, 32>}, {transform_indices = @transform_1, window_bounds = array<i64: 256, 32>}, {transform_indices = @transform_2, window_bounds = array<i64: 256, 32>}, {transform_indices = @transform_3, window_bounds = array<i64: 256, 32>}, {transform_indices = @transform_4, window_bounds = array<i64: 16, 32>}]} {
    %c0_i32 = arith.constant 0 : i32
    %0 = arith.cmpi eq, %arg1, %c0_i32 : i32
    %1 = arith.extui %0 : i1 to i32
    %c0_i32_0 = arith.constant 0 : i32
    %2 = arith.cmpi ne, %1, %c0_i32_0 : i32
    scf.if %2 {
      %cst_17 = arith.constant 0.000000e+00 : f32
      %23 = vector.broadcast %cst_17 : f32 to vector<16x32xf32>
      %c0_18 = arith.constant 0 : index
      %c0_19 = arith.constant 0 : index
      %24 = vector.load %arg7[%c0_18, %c0_19] : memref<16x32xf32, #tpu.memory_space<vmem>>, vector<16x32xf32>
      tpu.vector_store %arg7[%c0_18, %c0_19], %23 {strides = array<i32>} : memref<16x32xf32, #tpu.memory_space<vmem>>, vector<16x32xf32>,
    } else {
    }
    %c0 = arith.constant 0 : index
    %c0_1 = arith.constant 0 : index
    %3 = vector.load %arg2[%c0, %c0_1] : memref<16x32xf32, #tpu.memory_space<vmem>>, vector<16x32xf32>
    %c0_2 = arith.constant 0 : index
    %c0_3 = arith.constant 0 : index
    %4 = vector.load %arg3[%c0_2, %c0_3] : memref<256x32xf32, #tpu.memory_space<vmem>>, vector<256x32xf32>
    %cst = arith.constant dense<0.000000e+00> : vector<16x256xf32>
    %5 = tpu.matmul %3, %4, %cst {dimension_numbers = #tpu.dot_dimension_numbers<[1], [1], [0], [0], [0, 0, 1, 0], [], []>} : vector<16x32xf32>, vector<256x32xf32>, vector<16x256xf32> -> vector<16x256xf32>
    %c0_4 = arith.constant 0 : index
    %c0_5 = arith.constant 0 : index
    %6 = vector.load %arg4[%c0_4, %c0_5] : memref<256x32xf32, #tpu.memory_space<vmem>>, vector<256x32xf32>
    %cst_6 = arith.constant dense<0.000000e+00> : vector<16x256xf32>
    %7 = tpu.matmul %3, %6, %cst_6 {dimension_numbers = #tpu.dot_dimension_numbers<[1], [1], [0], [0], [0, 0, 1, 0], [], []>} : vector<16x32xf32>, vector<256x32xf32>, vector<16x256xf32> -> vector<16x256xf32>
    %8 = arith.negf %5 : vector<16x256xf32>
    %9 = math.exp %8 : vector<16x256xf32>
    %cst_7 = arith.constant 1.000000e+00 : f32
    %10 = vector.broadcast %cst_7 : f32 to vector<16x256xf32>
    %11 = arith.addf %10, %9 : vector<16x256xf32>
    %12 = arith.divf %10, %11 : vector<16x256xf32>
    %13 = arith.mulf %5, %12 : vector<16x256xf32>
    %14 = arith.mulf %13, %7 : vector<16x256xf32>
    %c0_8 = arith.constant 0 : index
    %c0_9 = arith.constant 0 : index
    %15 = vector.load %arg7[%c0_8, %c0_9] : memref<16x32xf32, #tpu.memory_space<vmem>>, vector<16x32xf32>
    %c0_10 = arith.constant 0 : index
    %c0_11 = arith.constant 0 : index
    %16 = vector.load %arg5[%c0_10, %c0_11] : memref<256x32xf32, #tpu.memory_space<vmem>>, vector<256x32xf32>
    %cst_12 = arith.constant dense<0.000000e+00> : vector<16x32xf32>
    %17 = tpu.matmul %14, %16, %cst_12 {dimension_numbers = #tpu.dot_dimension_numbers<[1], [0], [0], [1], [0, 0, 1, 1], [], []>} : vector<16x256xf32>, vector<256x32xf32>, vector<16x32xf32> -> vector<16x32xf32>
    %18 = arith.addf %15, %17 : vector<16x32xf32>
    %c0_13 = arith.constant 0 : index
    %c0_14 = arith.constant 0 : index
    %19 = vector.load %arg7[%c0_13, %c0_14] : memref<16x32xf32, #tpu.memory_space<vmem>>, vector<16x32xf32>
    tpu.vector_store %arg7[%c0_13, %c0_14], %18 {strides = array<i32>} : memref<16x32xf32, #tpu.memory_space<vmem>>, vector<16x32xf32>,
    %c0_i32_15 = arith.constant 0 : i32
    %20 = arith.cmpi eq, %arg1, %c0_i32_15 : i32
    %21 = arith.extui %20 : i1 to i32
    %c0_i32_16 = arith.constant 0 : i32
    %22 = arith.cmpi ne, %21, %c0_i32_16 : i32
    scf.if %22 {
      %c0_17 = arith.constant 0 : index
      %c0_18 = arith.constant 0 : index
      %23 = vector.load %arg7[%c0_17, %c0_18] : memref<16x32xf32, #tpu.memory_space<vmem>>, vector<16x32xf32>
      %c0_19 = arith.constant 0 : index
      %c0_20 = arith.constant 0 : index
      %24 = vector.load %arg6[%c0_19, %c0_20] : memref<16x32xf32, #tpu.memory_space<vmem>>, vector<16x32xf32>
      tpu.vector_store %arg6[%c0_19, %c0_20], %23 {strides = array<i32>} : memref<16x32xf32, #tpu.memory_space<vmem>>, vector<16x32xf32>,
    } else {
    }
    return
  }
  func.func @transform_0(%arg0: i32, %arg1: i32) -> (i32, i32) {
    %c0_i32 = arith.constant 0 : i32
    %c0_i32_0 = arith.constant 0 : i32
    return %arg0, %c0_i32 : i32, i32
  }
  func.func @transform_1(%arg0: i32, %arg1: i32) -> (i32, i32) {
    %c0_i32 = arith.constant 0 : i32
    %c0_i32_0 = arith.constant 0 : i32
    return %arg1, %c0_i32 : i32, i32
  }
  func.func @transform_2(%arg0: i32, %arg1: i32) -> (i32, i32) {
    %c0_i32 = arith.constant 0 : i32
    %c0_i32_0 = arith.constant 0 : i32
    return %arg1, %c0_i32 : i32, i32
  }
  func.func @transform_3(%arg0: i32, %arg1: i32) -> (i32, i32) {
    %c0_i32 = arith.constant 0 : i32
    %c0_i32_0 = arith.constant 0 : i32
    return %arg1, %c0_i32 : i32, i32
  }
  func.func @transform_4(%arg0: i32, %arg1: i32) -> (i32, i32) {
    %c0_i32 = arith.constant 0 : i32
    %c0_i32_0 = arith.constant 0 : i32
    return %arg0, %c0_i32 : i32, i32
  }
}

</mosaic_0001>

<llo_original>
// kernel: feed_forward.1
$region0: #{feed_forward.1}
  #allocation0 [shape = 'u32[]', space=smem, size = 0x4, offset = 0x4, fixed_abs, tag = 'smem constant byte address 0x4 - core index']
  #allocation1 [shape = 'u32[144,128]{1,0:T(1,128)}', space=vmem, size = 0x12000, scoped, tag = 'internal scratch']
  #allocation2 [shape = 'f32[16,32]{1,0:T(8,128)}', space=vmem, size = 0x2000, scoped, tag = 'scratch operand']
  %s0 = inlined_call_operand.vmem [shape: f32[16,32], index: 0, kind: input, shape index: {}]
  %s1 = inlined_call_operand.vmem [shape: f32[256,32], index: 1, kind: input, shape index: {}]
  %s2 = inlined_call_operand.vmem [shape: f32[256,32], index: 2, kind: input, shape index: {}]
  %s3 = inlined_call_operand.vmem [shape: f32[256,32], index: 3, kind: input, shape index: {}]
  %s4 = inlined_call_operand.hbm [shape: f32[16,32], index: 4, kind: output, shape index: {}]
  %s5 = sld [smem:[#allocation0]]
  $region34: #{feed_forward.1} parent=0
    _
  %s7 = ssub.s32 1, %s5
  %s8 = scalar_select 0, %s7, %s5
  $region1: #{feed_forward.1} parent=0
    #allocation3 [shape = 'u8[8192]{0}', space=vmem, size = 0x2000, scoped, tag = 'output window, operand 0, single buffered']
    #allocation4 [shape = 's32[1]{0}', space=sflag, size = 0x4, scoped, tag = 'scoped memory for feed_forward.1']
    %9 = vsyncpa [#allocation4], 0
    // Predicated region
    $region2: #{feed_forward.1} parent=1 // pred_check
      _
    $region3: #{feed_forward.1} parent=1 // pred_check_branch
      %11 = sbr.rel (0) target = $region5
    $region4: #{feed_forward.1} parent=1 // pred_region
      _
    $region5: #{feed_forward.1} parent=1 // pred_fallthru
      _
    // Predicated region
    $region6: #{feed_forward.1} parent=1 // pred_check
      _
    $region7: #{feed_forward.1} parent=1 // pred_check_branch
      %13 = sbr.rel (0) target = $region9
    $region8: #{feed_forward.1} parent=1 // pred_region
      _
    $region9: #{feed_forward.1} parent=1 // pred_fallthru
      _
    // Predicated region
    $region10: #{feed_forward.1} parent=1 // pred_check
      _
    $region11: #{feed_forward.1} parent=1 // pred_check_branch
      %15 = sbr.rel (0) target = $region13
    $region12: #{feed_forward.1} parent=1 // pred_region
      _
    $region13: #{feed_forward.1} parent=1 // pred_fallthru
      _
    // Predicated region
    $region14: #{feed_forward.1} parent=1 // pred_check
      _
    $region15: #{feed_forward.1} parent=1 // pred_check_branch
      %17 = sbr.rel (0) target = $region17
    $region16: #{feed_forward.1} parent=1 // pred_region
      _
    $region17: #{feed_forward.1} parent=1 // pred_fallthru
      _
    %p18 = scmp.eq.s32.totalorder 0, 0
    // Predicated region
    $region18: #{feed_forward.1} parent=1 // pred_check
      %p19 = pneg %p18
    $region19: #{feed_forward.1} parent=1 // pred_check_branch
      %21 = sbr.rel (%p19) target = $region21
    $region20: #{feed_forward.1} parent=1 // pred_region
      %vm22 = vcmask 261120
      %23 = vst.msk [vmem:[#allocation2] sm:$0xff] %vm22, 0.0
      %24 = vst.msk [vmem:[#allocation2 + $0x8] sm:$0xff] %vm22, 0.0
    $region21: #{feed_forward.1} parent=1 // pred_fallthru
      _
    %v25 = vld [vmem:[%s0] sm:$0xff]
    %v26 = vld [vmem:[%s0 + $0x8] sm:$0xff]
    %v27 = vld [vmem:[%s1] sm:$0xff]
    %v28 = vld [vmem:[%s1 + $0x8] sm:$0xff]
    %v29 = vld [vmem:[%s1 + $0x10] sm:$0xff]
    %v30 = vld [vmem:[%s1 + $0x18] sm:$0xff]
    %v31 = vld [vmem:[%s1 + $0x20] sm:$0xff]
    %v32 = vld [vmem:[%s1 + $0x28] sm:$0xff]
    %v33 = vld [vmem:[%s1 + $0x30] sm:$0xff]
    %v34 = vld [vmem:[%s1 + $0x38] sm:$0xff]
    %v35 = vld [vmem:[%s1 + $0x40] sm:$0xff]
    %v36 = vld [vmem:[%s1 + $0x48] sm:$0xff]
    %v37 = vld [vmem:[%s1 + $0x50] sm:$0xff]
    %v38 = vld [vmem:[%s1 + $0x58] sm:$0xff]
    %v39 = vld [vmem:[%s1 + $0x60] sm:$0xff]
    %v40 = vld [vmem:[%s1 + $0x68] sm:$0xff]
    %v41 = vld [vmem:[%s1 + $0x70] sm:$0xff]
    %v42 = vld [vmem:[%s1 + $0x78] sm:$0xff]
    %v43 = vld [vmem:[%s1 + $0x80] sm:$0xff]
    %v44 = vld [vmem:[%s1 + $0x88] sm:$0xff]
    %v45 = vld [vmem:[%s1 + $0x90] sm:$0xff]
    %v46 = vld [vmem:[%s1 + $0x98] sm:$0xff]
    %v47 = vld [vmem:[%s1 + $0xa0] sm:$0xff]
    %v48 = vld [vmem:[%s1 + $0xa8] sm:$0xff]
    %v49 = vld [vmem:[%s1 + $0xb0] sm:$0xff]
    %v50 = vld [vmem:[%s1 + $0xb8] sm:$0xff]
    %v51 = vld [vmem:[%s1 + $0xc0] sm:$0xff]
    %v52 = vld [vmem:[%s1 + $0xc8] sm:$0xff]
    %v53 = vld [vmem:[%s1 + $0xd0] sm:$0xff]
    %v54 = vld [vmem:[%s1 + $0xd8] sm:$0xff]
    %v55 = vld [vmem:[%s1 + $0xe0] sm:$0xff]
    %v56 = vld [vmem:[%s1 + $0xe8] sm:$0xff]
    %v57 = vld [vmem:[%s1 + $0xf0] sm:$0xff]
    %v58 = vld [vmem:[%s1 + $0xf8] sm:$0xff]
    %vm59 = vcmask 261120
    %v61 = vsel %vm59, %v25, 0
    %v64 = vsel %vm59, %v26, 0
    %v67 = vsel %vm59, %v27, 0
    %v70 = vsel %vm59, %v28, 0
    %v73 = vsel %vm59, %v29, 0
    %v76 = vsel %vm59, %v30, 0
    %v79 = vsel %vm59, %v31, 0
    %v82 = vsel %vm59, %v32, 0
    %v85 = vsel %vm59, %v33, 0
    %v88 = vsel %vm59, %v34, 0
    %v91 = vsel %vm59, %v35, 0
    %v94 = vsel %vm59, %v36, 0
    %v97 = vsel %vm59, %v37, 0
    %v100 = vsel %vm59, %v38, 0
    %v103 = vsel %vm59, %v39, 0
    %v106 = vsel %vm59, %v40, 0
    %v109 = vsel %vm59, %v41, 0
    %v112 = vsel %vm59, %v42, 0
    %v115 = vsel %vm59, %v43, 0
    %v118 = vsel %vm59, %v44, 0
    %v121 = vsel %vm59, %v45, 0
    %v124 = vsel %vm59, %v46, 0
    %v127 = vsel %vm59, %v47, 0
    %v130 = vsel %vm59, %v48, 0
    %v133 = vsel %vm59, %v49, 0
    %v136 = vsel %vm59, %v50, 0
    %v139 = vsel %vm59, %v51, 0
    %v142 = vsel %vm59, %v52, 0
    %v145 = vsel %vm59, %v53, 0
    %v148 = vsel %vm59, %v54, 0
    %v151 = vsel %vm59, %v55, 0
    %v154 = vsel %vm59, %v56, 0
    %v157 = vsel %vm59, %v57, 0
    %v160 = vsel %vm59, %v58, 0
    %162 = vmatprep.subr.mxu0 0.0
    %163 = vmatpush1.xpose.msra.mxu0 %v67
    %164 = vmatprep.subr.mxu0 0.0
    %165 = vmatpush1.xpose.msra.mxu0 %v70
    %166 = vmatprep.subr.mxu0 0.0
    %167 = vmatpush1.xpose.msra.mxu0 %v73
    %168 = vmatprep.subr.mxu0 0.0
    %169 = vmatpush1.xpose.msra.mxu0 %v76
    %170 = vmatprep.subr.mxu0 0.0
    %171 = vmatpush1.xpose.msra.mxu0 %v79
    %172 = vmatprep.subr.mxu0 0.0
    %173 = vmatpush1.xpose.msra.mxu0 %v82
    %174 = vmatprep.subr.mxu0 0.0
    %175 = vmatpush1.xpose.msra.mxu0 %v85
    %176 = vmatprep.subr.mxu0 0.0
    %177 = vmatpush1.xpose.msra.mxu0 %v88
    %178 = vmatprep.subr.mxu0 0.0
    %179 = vmatpush1.xpose.msra.mxu0 %v91
    %180 = vmatprep.subr.mxu0 0.0
    %181 = vmatpush1.xpose.msra.mxu0 %v94
    %182 = vmatprep.subr.mxu0 0.0
    %183 = vmatpush1.xpose.msra.mxu0 %v97
    %184 = vmatprep.subr.mxu0 0.0
    %185 = vmatpush1.xpose.msra.mxu0 %v100
    %186 = vmatprep.subr.mxu0 0.0
    %187 = vmatpush1.xpose.msra.mxu0 %v103
    %188 = vmatprep.subr.mxu0 0.0
    %189 = vmatpush1.xpose.msra.mxu0 %v106
    %190 = vmatprep.subr.mxu0 0.0
    %191 = vmatpush1.xpose.msra.mxu0 %v109
    %192 = vmatprep.subr.mxu0 0.0
    %193 = vmatpush1.xpose.msra.mxu0 %v112
    %194 = vmatprep.subr.mxu0 0.0
    %195 = vmatpush1.xpose.msra.mxu0 %v115
    %196 = vmatprep.subr.mxu0 0.0
    %197 = vmatpush1.xpose.msra.mxu0 %v118
    %198 = vmatprep.subr.mxu0 0.0
    %199 = vmatpush1.xpose.msra.mxu0 %v121
    %200 = vmatprep.subr.mxu0 0.0
    %201 = vmatpush1.xpose.msra.mxu0 %v124
    %202 = vmatprep.subr.mxu0 0.0
    %203 = vmatpush1.xpose.msra.mxu0 %v127
    %204 = vmatprep.subr.mxu0 0.0
    %205 = vmatpush1.xpose.msra.mxu0 %v130
    %206 = vmatprep.subr.mxu0 0.0
    %207 = vmatpush1.xpose.msra.mxu0 %v133
    %208 = vmatprep.subr.mxu0 0.0
    %209 = vmatpush1.xpose.msra.mxu0 %v136
    %210 = vmatprep.subr.mxu0 0.0
    %211 = vmatpush1.xpose.msra.mxu0 %v139
    %212 = vmatprep.subr.mxu0 0.0
    %213 = vmatpush1.xpose.msra.mxu0 %v142
    %214 = vmatprep.subr.mxu0 0.0
    %215 = vmatpush1.xpose.msra.mxu0 %v145
    %216 = vmatprep.subr.mxu0 0.0
    %217 = vmatpush1.xpose.msra.mxu0 %v148
    %218 = vmatprep.subr.mxu0 0.0
    %219 = vmatpush1.xpose.msra.mxu0 %v151
    %220 = vmatprep.subr.mxu0 0.0
    %221 = vmatpush1.xpose.msra.mxu0 %v154
    %222 = vmatprep.subr.mxu0 0.0
    %223 = vmatpush1.xpose.msra.mxu0 %v157
    %224 = vmatprep.subr.mxu0 0.0
    %225 = vmatpush1.xpose.msra.mxu0 %v160
    %226 = vmatprep.mubr.f32.mxu0 0.0
    %227 = vmatmul.mubr.f32.gmra.mrb[0].mxu0 %v61
    %v228 = vpop.f32.mrb[0].mxu0
    %v229 = vadd.f32 0.0, %v228
    %v230 = vpop.f32.mrb[0].mxu0
    %v231 = vadd.f32 0.0, %v230
    %232 = vmatprep.mubr.f32.mxu0 0.0
    %233 = vmatmul.mubr.f32.gmra.mrb[0].mxu0 %v64
    %v234 = vpop.f32.mrb[0].mxu0
    %v235 = vadd.f32 0.0, %v234
    %v236 = vpop.f32.mrb[0].mxu0
    %v237 = vadd.f32 0.0, %v236
    %238 = vdwg.mxu0
    %v239 = vld [vmem:[%s2] sm:$0xff]
    %v240 = vld [vmem:[%s2 + $0x8] sm:$0xff]
    %v241 = vld [vmem:[%s2 + $0x10] sm:$0xff]
    %v242 = vld [vmem:[%s2 + $0x18] sm:$0xff]
    %v243 = vld [vmem:[%s2 + $0x20] sm:$0xff]
    %v244 = vld [vmem:[%s2 + $0x28] sm:$0xff]
    %v245 = vld [vmem:[%s2 + $0x30] sm:$0xff]
    %v246 = vld [vmem:[%s2 + $0x38] sm:$0xff]
    %v247 = vld [vmem:[%s2 + $0x40] sm:$0xff]
    %v248 = vld [vmem:[%s2 + $0x48] sm:$0xff]
    %v249 = vld [vmem:[%s2 + $0x50] sm:$0xff]
    %v250 = vld [vmem:[%s2 + $0x58] sm:$0xff]
    %v251 = vld [vmem:[%s2 + $0x60] sm:$0xff]
    %v252 = vld [vmem:[%s2 + $0x68] sm:$0xff]
    %v253 = vld [vmem:[%s2 + $0x70] sm:$0xff]
    %v254 = vld [vmem:[%s2 + $0x78] sm:$0xff]
    %v255 = vld [vmem:[%s2 + $0x80] sm:$0xff]
    %v256 = vld [vmem:[%s2 + $0x88] sm:$0xff]
    %v257 = vld [vmem:[%s2 + $0x90] sm:$0xff]
    %v258 = vld [vmem:[%s2 + $0x98] sm:$0xff]
    %v259 = vld [vmem:[%s2 + $0xa0] sm:$0xff]
    %v260 = vld [vmem:[%s2 + $0xa8] sm:$0xff]
    %v261 = vld [vmem:[%s2 + $0xb0] sm:$0xff]
    %v262 = vld [vmem:[%s2 + $0xb8] sm:$0xff]
    %v263 = vld [vmem:[%s2 + $0xc0] sm:$0xff]
    %v264 = vld [vmem:[%s2 + $0xc8] sm:$0xff]
    %v265 = vld [vmem:[%s2 + $0xd0] sm:$0xff]
    %v266 = vld [vmem:[%s2 + $0xd8] sm:$0xff]
    %v267 = vld [vmem:[%s2 + $0xe0] sm:$0xff]
    %v268 = vld [vmem:[%s2 + $0xe8] sm:$0xff]
    %v269 = vld [vmem:[%s2 + $0xf0] sm:$0xff]
    %v270 = vld [vmem:[%s2 + $0xf8] sm:$0xff]
    %v272 = vsel %vm59, %v239, 0
    %v275 = vsel %vm59, %v240, 0
    %v278 = vsel %vm59, %v241, 0
    %v281 = vsel %vm59, %v242, 0
    %v284 = vsel %vm59, %v243, 0
    %v287 = vsel %vm59, %v244, 0
    %v290 = vsel %vm59, %v245, 0
    %v293 = vsel %vm59, %v246, 0
    %v296 = vsel %vm59, %v247, 0
    %v299 = vsel %vm59, %v248, 0
    %v302 = vsel %vm59, %v249, 0
    %v305 = vsel %vm59, %v250, 0
    %v308 = vsel %vm59, %v251, 0
    %v311 = vsel %vm59, %v252, 0
    %v314 = vsel %vm59, %v253, 0
    %v317 = vsel %vm59, %v254, 0
    %v320 = vsel %vm59, %v255, 0
    %v323 = vsel %vm59, %v256, 0
    %v326 = vsel %vm59, %v257, 0
    %v329 = vsel %vm59, %v258, 0
    %v332 = vsel %vm59, %v259, 0
    %v335 = vsel %vm59, %v260, 0
    %v338 = vsel %vm59, %v261, 0
    %v341 = vsel %vm59, %v262, 0
    %v344 = vsel %vm59, %v263, 0
    %v347 = vsel %vm59, %v264, 0
    %v350 = vsel %vm59, %v265, 0
    %v353 = vsel %vm59, %v266, 0
    %v356 = vsel %vm59, %v267, 0
    %v359 = vsel %vm59, %v268, 0
    %v362 = vsel %vm59, %v269, 0
    %v365 = vsel %vm59, %v270, 0
    %367 = vmatprep.subr.mxu0 0.0
    %368 = vmatpush1.xpose.msra.mxu0 %v272
    %369 = vmatprep.subr.mxu0 0.0
    %370 = vmatpush1.xpose.msra.mxu0 %v275
    %371 = vmatprep.subr.mxu0 0.0
    %372 = vmatpush1.xpose.msra.mxu0 %v278
    %373 = vmatprep.subr.mxu0 0.0
    %374 = vmatpush1.xpose.msra.mxu0 %v281
    %375 = vmatprep.subr.mxu0 0.0
    %376 = vmatpush1.xpose.msra.mxu0 %v284
    %377 = vmatprep.subr.mxu0 0.0
    %378 = vmatpush1.xpose.msra.mxu0 %v287
    %379 = vmatprep.subr.mxu0 0.0
    %380 = vmatpush1.xpose.msra.mxu0 %v290
    %381 = vmatprep.subr.mxu0 0.0
    %382 = vmatpush1.xpose.msra.mxu0 %v293
    %383 = vmatprep.subr.mxu0 0.0
    %384 = vmatpush1.xpose.msra.mxu0 %v296
    %385 = vmatprep.subr.mxu0 0.0
    %386 = vmatpush1.xpose.msra.mxu0 %v299
    %387 = vmatprep.subr.mxu0 0.0
    %388 = vmatpush1.xpose.msra.mxu0 %v302
    %389 = vmatprep.subr.mxu0 0.0
    %390 = vmatpush1.xpose.msra.mxu0 %v305
    %391 = vmatprep.subr.mxu0 0.0
    %392 = vmatpush1.xpose.msra.mxu0 %v308
    %393 = vmatprep.subr.mxu0 0.0
    %394 = vmatpush1.xpose.msra.mxu0 %v311
    %395 = vmatprep.subr.mxu0 0.0
    %396 = vmatpush1.xpose.msra.mxu0 %v314
    %397 = vmatprep.subr.mxu0 0.0
    %398 = vmatpush1.xpose.msra.mxu0 %v317
    %399 = vmatprep.subr.mxu0 0.0
    %400 = vmatpush1.xpose.msra.mxu0 %v320
    %401 = vmatprep.subr.mxu0 0.0
    %402 = vmatpush1.xpose.msra.mxu0 %v323
    %403 = vmatprep.subr.mxu0 0.0
    %404 = vmatpush1.xpose.msra.mxu0 %v326
    %405 = vmatprep.subr.mxu0 0.0
    %406 = vmatpush1.xpose.msra.mxu0 %v329
    %407 = vmatprep.subr.mxu0 0.0
    %408 = vmatpush1.xpose.msra.mxu0 %v332
    %409 = vmatprep.subr.mxu0 0.0
    %410 = vmatpush1.xpose.msra.mxu0 %v335
    %411 = vmatprep.subr.mxu0 0.0
    %412 = vmatpush1.xpose.msra.mxu0 %v338
    %413 = vmatprep.subr.mxu0 0.0
    %414 = vmatpush1.xpose.msra.mxu0 %v341
    %415 = vmatprep.subr.mxu0 0.0
    %416 = vmatpush1.xpose.msra.mxu0 %v344
    %417 = vmatprep.subr.mxu0 0.0
    %418 = vmatpush1.xpose.msra.mxu0 %v347
    %419 = vmatprep.subr.mxu0 0.0
    %420 = vmatpush1.xpose.msra.mxu0 %v350
    %421 = vmatprep.subr.mxu0 0.0
    %422 = vmatpush1.xpose.msra.mxu0 %v353
    %423 = vmatprep.subr.mxu0 0.0
    %424 = vmatpush1.xpose.msra.mxu0 %v356
    %425 = vmatprep.subr.mxu0 0.0
    %426 = vmatpush1.xpose.msra.mxu0 %v359
    %427 = vmatprep.subr.mxu0 0.0
    %428 = vmatpush1.xpose.msra.mxu0 %v362
    %429 = vmatprep.subr.mxu0 0.0
    %430 = vmatpush1.xpose.msra.mxu0 %v365
    %431 = vmatprep.mubr.f32.mxu0 0.0
    %432 = vmatmul.mubr.f32.gmra.mrb[0].mxu0 %v61
    %v433 = vpop.f32.mrb[0].mxu0
    %v434 = vadd.f32 0.0, %v433
    %v435 = vpop.f32.mrb[0].mxu0
    %v436 = vadd.f32 0.0, %v435
    %437 = vmatprep.mubr.f32.mxu0 0.0
    %438 = vmatmul.mubr.f32.gmra.mrb[0].mxu0 %v64
    %v439 = vpop.f32.mrb[0].mxu0
    %v440 = vadd.f32 0.0, %v439
    %v441 = vpop.f32.mrb[0].mxu0
    %v442 = vadd.f32 0.0, %v441
    %443 = vdwg.mxu0
    %v444 = vxor.u32 %v229, 2147483648
    %v445 = vxor.u32 %v231, 2147483648
    %v446 = vxor.u32 %v235, 2147483648
    %v447 = vxor.u32 %v237, 2147483648
    %v448 = vmul.f32 %v444, 1.442695
    %v449 = vpow.pop %v448
    %v450 = vmul.f32 %v445, 1.442695
    %v451 = vpow.pop %v450
    %v452 = vmul.f32 %v446, 1.442695
    %v453 = vpow.pop %v452
    %v454 = vmul.f32 %v447, 1.442695
    %v455 = vpow.pop %v454
    %v456 = vadd.f32 %v449, 1.0
    %v457 = vadd.f32 %v451, 1.0
    %v458 = vadd.f32 %v453, 1.0
    %v459 = vadd.f32 %v455, 1.0
    %v460 = vrcp.pop %v456
    %v461 = vmul.f32 1.0, %v460
    %v462 = vrcp.pop %v457
    %v463 = vmul.f32 1.0, %v462
    %v464 = vrcp.pop %v458
    %v465 = vmul.f32 1.0, %v464
    %v466 = vrcp.pop %v459
    %v467 = vmul.f32 1.0, %v466
    %v468 = vmul.f32 %v229, %v461
    %v469 = vmul.f32 %v231, %v463
    %v470 = vmul.f32 %v235, %v465
    %v471 = vmul.f32 %v237, %v467
    %v472 = vmul.f32 %v468, %v434
    %v473 = vmul.f32 %v469, %v436
    %v474 = vmul.f32 %v470, %v440
    %v475 = vmul.f32 %v471, %v442
    %v476 = vld [vmem:[#allocation2] sm:$0xff]
    %v477 = vld [vmem:[#allocation2 + $0x8] sm:$0xff]
    %v478 = vld [vmem:[%s3] sm:$0xff]
    %v479 = vld [vmem:[%s3 + $0x8] sm:$0xff]
    %v480 = vld [vmem:[%s3 + $0x10] sm:$0xff]
    %v481 = vld [vmem:[%s3 + $0x18] sm:$0xff]
    %v482 = vld [vmem:[%s3 + $0x20] sm:$0xff]
    %v483 = vld [vmem:[%s3 + $0x28] sm:$0xff]
    %v484 = vld [vmem:[%s3 + $0x30] sm:$0xff]
    %v485 = vld [vmem:[%s3 + $0x38] sm:$0xff]
    %v486 = vld [vmem:[%s3 + $0x40] sm:$0xff]
    %v487 = vld [vmem:[%s3 + $0x48] sm:$0xff]
    %v488 = vld [vmem:[%s3 + $0x50] sm:$0xff]
    %v489 = vld [vmem:[%s3 + $0x58] sm:$0xff]
    %v490 = vld [vmem:[%s3 + $0x60] sm:$0xff]
    %v491 = vld [vmem:[%s3 + $0x68] sm:$0xff]
    %v492 = vld [vmem:[%s3 + $0x70] sm:$0xff]
    %v493 = vld [vmem:[%s3 + $0x78] sm:$0xff]
    %v494 = vld [vmem:[%s3 + $0x80] sm:$0xff]
    %v495 = vld [vmem:[%s3 + $0x88] sm:$0xff]
    %v496 = vld [vmem:[%s3 + $0x90] sm:$0xff]
    %v497 = vld [vmem:[%s3 + $0x98] sm:$0xff]
    %v498 = vld [vmem:[%s3 + $0xa0] sm:$0xff]
    %v499 = vld [vmem:[%s3 + $0xa8] sm:$0xff]
    %v500 = vld [vmem:[%s3 + $0xb0] sm:$0xff]
    %v501 = vld [vmem:[%s3 + $0xb8] sm:$0xff]
    %v502 = vld [vmem:[%s3 + $0xc0] sm:$0xff]
    %v503 = vld [vmem:[%s3 + $0xc8] sm:$0xff]
    %v504 = vld [vmem:[%s3 + $0xd0] sm:$0xff]
    %v505 = vld [vmem:[%s3 + $0xd8] sm:$0xff]
    %v506 = vld [vmem:[%s3 + $0xe0] sm:$0xff]
    %v507 = vld [vmem:[%s3 + $0xe8] sm:$0xff]
    %v508 = vld [vmem:[%s3 + $0xf0] sm:$0xff]
    %v509 = vld [vmem:[%s3 + $0xf8] sm:$0xff]
    %510 = vmatprep.subr.mxu0 0.0
    %511 = vmatpush1.msra.mxu0 %v478
    %512 = vmatprep.subr.mxu0 0.0
    %513 = vmatpush1.msra.mxu0 %v479
    %514 = vmatprep.subr.mxu0 0.0
    %515 = vmatpush1.msra.mxu0 %v480
    %516 = vmatprep.subr.mxu0 0.0
    %517 = vmatpush1.msra.mxu0 %v481
    %518 = vmatprep.subr.mxu0 0.0
    %519 = vmatpush1.msra.mxu0 %v482
    %520 = vmatprep.subr.mxu0 0.0
    %521 = vmatpush1.msra.mxu0 %v483
    %522 = vmatprep.subr.mxu0 0.0
    %523 = vmatpush1.msra.mxu0 %v484
    %524 = vmatprep.subr.mxu0 0.0
    %525 = vmatpush1.msra.mxu0 %v485
    %526 = vmatprep.subr.mxu0 0.0
    %527 = vmatpush1.msra.mxu0 %v486
    %528 = vmatprep.subr.mxu0 0.0
    %529 = vmatpush1.msra.mxu0 %v487
    %530 = vmatprep.subr.mxu0 0.0
    %531 = vmatpush1.msra.mxu0 %v488
    %532 = vmatprep.subr.mxu0 0.0
    %533 = vmatpush1.msra.mxu0 %v489
    %534 = vmatprep.subr.mxu0 0.0
    %535 = vmatpush1.msra.mxu0 %v490
    %536 = vmatprep.subr.mxu0 0.0
    %537 = vmatpush1.msra.mxu0 %v491
    %538 = vmatprep.subr.mxu0 0.0
    %539 = vmatpush1.msra.mxu0 %v492
    %540 = vmatprep.subr.mxu0 0.0
    %541 = vmatpush1.msra.mxu0 %v493
    %542 = vmatprep.subr.mxu0 0.0
    %543 = vmatpush1.msra.mxu0 %v494
    %544 = vmatprep.subr.mxu0 0.0
    %545 = vmatpush1.msra.mxu0 %v495
    %546 = vmatprep.subr.mxu0 0.0
    %547 = vmatpush1.msra.mxu0 %v496
    %548 = vmatprep.subr.mxu0 0.0
    %549 = vmatpush1.msra.mxu0 %v497
    %550 = vmatprep.subr.mxu0 0.0
    %551 = vmatpush1.msra.mxu0 %v498
    %552 = vmatprep.subr.mxu0 0.0
    %553 = vmatpush1.msra.mxu0 %v499
    %554 = vmatprep.subr.mxu0 0.0
    %555 = vmatpush1.msra.mxu0 %v500
    %556 = vmatprep.subr.mxu0 0.0
    %557 = vmatpush1.msra.mxu0 %v501
    %558 = vmatprep.subr.mxu0 0.0
    %559 = vmatpush1.msra.mxu0 %v502
    %560 = vmatprep.subr.mxu0 0.0
    %561 = vmatpush1.msra.mxu0 %v503
    %562 = vmatprep.subr.mxu0 0.0
    %563 = vmatpush1.msra.mxu0 %v504
    %564 = vmatprep.subr.mxu0 0.0
    %565 = vmatpush1.msra.mxu0 %v505
    %566 = vmatprep.subr.mxu0 0.0
    %567 = vmatpush1.msra.mxu0 %v506
    %568 = vmatprep.subr.mxu0 0.0
    %569 = vmatpush1.msra.mxu0 %v507
    %570 = vmatprep.subr.mxu0 0.0
    %571 = vmatpush1.msra.mxu0 %v508
    %572 = vmatprep.subr.mxu0 0.0
    %573 = vmatpush1.msra.mxu0 %v509
    %574 = vmatprep.mubr.f32.mxu0 %v473
    %575 = vmatmul.mubr.f32.gmra.mrb[0].mxu0 %v472
    %v576 = vpop.f32.mrb[0].mxu0
    %v577 = vadd.f32 0.0, %v576
    %v578 = vpop.f32.mrb[0].mxu0
    %579 = vmatprep.mubr.f32.mxu0 %v475
    %580 = vmatmul.mubr.f32.gmra.mrb[0].mxu0 %v474
    %v581 = vpop.f32.mrb[0].mxu0
    %v582 = vadd.f32 0.0, %v581
    %v583 = vpop.f32.mrb[0].mxu0
    %584 = vdwg.mxu0
    %v585 = vadd.f32 %v476, %v577
    %v586 = vadd.f32 %v477, %v582
    %587 = vst.msk [vmem:[#allocation2] sm:$0xff] %vm59, %v585
    %588 = vst.msk [vmem:[#allocation2 + $0x8] sm:$0xff] %vm59, %v586
    // Predicated region
    $region22: #{feed_forward.1} parent=1 // pred_check
      %p589 = pneg %p18
    $region23: #{feed_forward.1} parent=1 // pred_check_branch
      %591 = sbr.rel (%p589) target = $region25
    $region24: #{feed_forward.1} parent=1 // pred_region
      %v592 = vld [vmem:[#allocation2] sm:$0xff]
      %v593 = vld [vmem:[#allocation2 + $0x8] sm:$0xff]
      %594 = vst.msk [vmem:[#allocation3] sm:$0xff] %vm59, %v592
      %595 = vst.msk [vmem:[#allocation3 + $0x8] sm:$0xff] %vm59, %v593
    $region25: #{feed_forward.1} parent=1 // pred_fallthru
      _
    // Predicated region
    $region26: #{feed_forward.1} parent=1 // pred_check
      _
    $region27: #{feed_forward.1} parent=1 // pred_check_branch
      %597 = sbr.rel (0) target = $region29
    $region28: #{feed_forward.1} parent=1 // pred_region
      %s599 = ssub.s32 256, 256
      %600 = vsyncadd [#allocation4], %s599
      %s601 = sshll.u32 [#allocation3], 4
      %s602 = int_to_ptr.vmem [resolvable:$true] %s601
      %607 = dma.vmem_to_hbm [thread:$0]  %s602, 256, %s4, [#allocation4], 128, 128, 8
    $region29: #{feed_forward.1} parent=1 // pred_fallthru
      _
    // Predicated region
    $region30: #{feed_forward.1} parent=1 // pred_check
      _
    $region31: #{feed_forward.1} parent=1 // pred_check_branch
      %609 = sbr.rel (0) target = $region33
    $region32: #{feed_forward.1} parent=1 // pred_region
      %610 = dma.done [#allocation4], 256
    $region33: #{feed_forward.1} parent=1 // pred_fallthru
      _
    %611 = vsyncpa [#allocation4], 1

</llo_original>
